<compile_context>
chip_gen: v5e
topology: v5e:2x2
jax: 0.10.0
libtpu: 0.0.40
codegen_flags: <defaults>
</compile_context>

<pallas_src>
import functools

import jax
import jax.numpy as jnp
from jax.experimental import pallas as pl
from jax.experimental.pallas import tpu as pltpu


def _normalize_kernel(x_ref, o_ref, *, power):
    # Block layouts: (TILE_N, C, TILE_R, 128) or (1, C, TILE_HW).
    # Channel axis is axis 1 in both cases.
    x = x_ref[...].astype(jnp.float32)
    if power == 2:
        s = jnp.sum(x * x, axis=1, keepdims=True)
        inv = jax.lax.rsqrt(s)                      # single EUP op per column
    else:
        p_int = int(power)
        if float(p_int) == float(power):
            xp = jax.lax.integer_pow(x, p_int)      # VPU multiplies, no exp/log
        else:
            xp = x ** power                         # matches torch for non-int p
        s = jnp.sum(xp, axis=1, keepdims=True)
        inv = s ** (-1.0 / power)                   # one pow per reduced column
    o_ref[...] = (x * inv).astype(o_ref.dtype)


def normalize(x, power=2, target_block_bytes=8 * 1024 * 1024):
    """x: (N, C, H, W) -> (N, C, H, W), Lp-normalized over C per spatial position."""
    N, C, H, W = x.shape
    HW = H * W
    kernel = functools.partial(_normalize_kernel, power=power)
    # Budget block sizes in f32 elements so the in-kernel f32 upcast of bf16
    # inputs is covered by the same budget.
    target_elems = max(128, target_block_bytes // 4)
    cparams = pltpu.CompilerParams(
        dimension_semantics=("parallel", "parallel"),
        vmem_limit_bytes=48 * 1024 * 1024,
    )

    if HW % 128 == 0:
        # Preferred layout: C off the minor (sublane/lane) dims -> dense vregs
        # for any C and a pure-VPU channel reduction.  Reshape is contiguous.
        R = HW // 128
        x4 = x.reshape(N, C, R, 128)
        per_image = C * R * 128
        if per_image <= target_elems:
            # One whole image is small: block over N so each grid step still
            # moves a large slab.
            tile_r = R
            tile_n = max(1, min(N, target_elems // per_image))
            if N > 1:  # keep >=2 parallel grid steps so v7x can use both cores
                tile_n = min(tile_n, pl.cdiv(N, 2))
        else:
            tile_n = 1
            tile_r = max(8, (target_elems // (C * 128)) // 8 * 8)
            tile_r = min(tile_r, R)  # R < 8 -> full dim (allowed by (8,128) rule)
        out4 = pl.pallas_call(
            kernel,
            out_shape=jax.ShapeDtypeStruct((N, C, R, 128), x.dtype),
            grid_spec=pltpu.PrefetchScalarGridSpec(
                num_scalar_prefetch=0,
                grid=(pl.cdiv(N, tile_n), pl.cdiv(R, tile_r)),
                in_specs=[pl.BlockSpec((tile_n, C, tile_r, 128),
                                       lambda i, j: (i, 0, j, 0))],
                out_specs=pl.BlockSpec((tile_n, C, tile_r, 128),
                                       lambda i, j: (i, 0, j, 0)),
            ),
            compiler_params=cparams,
        )(x4)
        return out4.reshape(N, C, H, W)

    # Fallback: HW not a multiple of 128.  Keep (N, C, HW) with C on the
    # sublane axis; no padding -- the ragged last spatial tile is masked on
    # writeback by Pallas, and the reduction is over C so tail-lane garbage
    # never contaminates valid columns.
    x3 = x.reshape(N, C, HW)
    if HW <= 128:
        tile_hw = HW                                   # full dim (allowed)
    else:
        tile_hw = max(128, (target_elems // C) // 128 * 128)
        tile_hw = min(tile_hw, (HW // 128) * 128)      # keep multiple of 128
    out3 = pl.pallas_call(
        kernel,
        out_shape=jax.ShapeDtypeStruct((N, C, HW), x.dtype),
        grid_spec=pltpu.PrefetchScalarGridSpec(
            num_scalar_prefetch=0,
            grid=(N, pl.cdiv(HW, tile_hw)),
            in_specs=[pl.BlockSpec((1, C, tile_hw), lambda n, t: (n, 0, t))],
            out_specs=pl.BlockSpec((1, C, tile_hw), lambda n, t: (n, 0, t)),
        ),
        compiler_params=cparams,
    )(x3)
    return out3.reshape(N, C, H, W)


def _reference(x, power=2):
    norm = jnp.sum(x ** power, axis=1, keepdims=True) ** (1.0 / power)
    return x / norm


if __name__ == "__main__":
    key = jax.random.PRNGKey(0)
    x = jax.random.normal(key, (2, 4, 16, 16), dtype=jnp.float32)

    out = normalize(x, power=2)
    jax.block_until_ready(out)
    ref = _reference(x, power=2)
    assert out.shape == x.shape and out.dtype == x.dtype
    assert jnp.allclose(out, ref, atol=1e-5, rtol=1e-5), "mismatch vs reference (p=2)"

    # Also exercise the generic integer-power path and the ragged-HW fallback
    # layout (H*W not a multiple of 128).
    x2 = jax.random.normal(jax.random.PRNGKey(0), (2, 3, 10, 10), dtype=jnp.float32)
    out2 = normalize(x2, power=4)
    jax.block_until_ready(out2)
    ref2 = _reference(x2, power=4)
    assert jnp.allclose(out2, ref2, atol=1e-5, rtol=1e-5), "mismatch vs reference (p=4)"

    print("KERNEL_OK")
</pallas_src>

<mosaic_0001>
module attributes {stable_mosaic.version = 11 : i64} {
  func.func @_normalize_kernel(%arg0: i32, %arg1: i32, %arg2: memref<1x4x2x128xf32, #tpu.memory_space<vmem>>, %arg3: memref<1x4x2x128xf32, #tpu.memory_space<vmem>>) attributes {dimension_semantics = [#tpu.dimension_semantics<parallel>, #tpu.dimension_semantics<parallel>], iteration_bounds = array<i64: 2, 1>, scalar_prefetch = 0 : i64, scratch_operands = 0 : i64, tpu.core_type = #tpu.core_type<tc>, window_params = [{transform_indices = @transform_0, window_bounds = array<i64: 1, 4, 2, 128>}, {transform_indices = @transform_1, window_bounds = array<i64: 1, 4, 2, 128>}]} {
    %c0 = arith.constant 0 : index
    %c0_0 = arith.constant 0 : index
    %c0_1 = arith.constant 0 : index
    %c0_2 = arith.constant 0 : index
    %0 = vector.load %arg2[%c0, %c0_0, %c0_1, %c0_2] : memref<1x4x2x128xf32, #tpu.memory_space<vmem>>, vector<1x4x2x128xf32>
    %1 = arith.mulf %0, %0 : vector<1x4x2x128xf32>
    %cst = arith.constant dense<0.000000e+00> : vector<1x2x128xf32>
    %2 = vector.multi_reduction <add>, %1, %cst [1] : vector<1x4x2x128xf32> to vector<1x2x128xf32>
    %3 = vector.shape_cast %2 : vector<1x2x128xf32> to vector<1x1x2x128xf32>
    %4 = math.rsqrt %3 : vector<1x1x2x128xf32>
    %5 = vector.broadcast %4 : vector<1x1x2x128xf32> to vector<1x4x2x128xf32>
    %6 = arith.mulf %0, %5 : vector<1x4x2x128xf32>
    %c0_3 = arith.constant 0 : index
    %c0_4 = arith.constant 0 : index
    %c0_5 = arith.constant 0 : index
    %c0_6 = arith.constant 0 : index
    %7 = vector.load %arg3[%c0_3, %c0_4, %c0_5, %c0_6] : memref<1x4x2x128xf32, #tpu.memory_space<vmem>>, vector<1x4x2x128xf32>
    tpu.vector_store %arg3[%c0_3, %c0_4, %c0_5, %c0_6], %6 {strides = array<i32>} : memref<1x4x2x128xf32, #tpu.memory_space<vmem>>, vector<1x4x2x128xf32>,
    return
  }
  func.func @transform_0(%arg0: i32, %arg1: i32) -> (i32, i32, i32, i32) {
    %c0_i32 = arith.constant 0 : i32
    %c0_i32_0 = arith.constant 0 : i32
    %c0_i32_1 = arith.constant 0 : i32
    return %arg0, %c0_i32, %arg1, %c0_i32_0 : i32, i32, i32, i32
  }
  func.func @transform_1(%arg0: i32, %arg1: i32) -> (i32, i32, i32, i32) {
    %c0_i32 = arith.constant 0 : i32
    %c0_i32_0 = arith.constant 0 : i32
    %c0_i32_1 = arith.constant 0 : i32
    return %arg0, %c0_i32, %arg1, %c0_i32_0 : i32, i32, i32, i32
  }
}

</mosaic_0001>

<llo_original>
// kernel: tpu_custom_call.1
$region0: #{tpu_custom_call.1}
  #allocation0 [shape = 'u32[]', space=smem, size = 0x4, offset = 0x4, fixed_abs, tag = 'smem constant byte address 0x4 - core index']
  #allocation1 [shape = 'u32[72,128]{1,0:T(1,128)}', space=vmem, size = 0x9000, scoped, tag = 'internal scratch']
  %s0 = inlined_call_operand.hbm [shape: f32[2,4,2,128], index: 0, kind: input, shape index: {}]
  %s1 = inlined_call_operand.hbm [shape: f32[2,4,2,128], index: 1, kind: output, shape index: {}]
  %s2 = sld [smem:[#allocation0]]
  $region41: #{tpu_custom_call.1} parent=0
    _
  %s4 = ssub.s32 1, %s2
  %s5 = scalar_select 0, %s4, %s2
  $region1: #{tpu_custom_call.1} parent=0
    #allocation2 [shape = 'u8[8192]{0}', space=vmem, size = 0x2000, scoped, tag = 'input window, operand 0']
    #allocation3 [shape = 's32[2]{0}', space=sflag, size = 0x8, scoped, tag = 'scoped memory for tpu_custom_call.1']
    #allocation4 [shape = 's32[2]{0}', space=sflag, size = 0x8, scoped, tag = 'scoped memory for tpu_custom_call.1']
    #allocation5 [shape = 'u8[8192]{0}', space=vmem, size = 0x2000, scoped, tag = 'output window, operand 0']
    %6 = vsyncpa [#allocation3], 0
    %s7 = scalar_lea.sflag [#allocation3], 1
    %8 = vsyncpa %s7, 0
    %9 = vsyncpa [#allocation4], 0
    %s10 = scalar_lea.sflag [#allocation4], 1
    %11 = vsyncpa %s10, 0
    loop: start=0, step=1, limit=4
    $region2: #{tpu_custom_call.1} parent=1 // loop_pre_header
      _
    $region3: #{tpu_custom_call.1} parent=1 // loop_header
      %s13 = sphi 0, %s17
      %p14 = scmp.ge.s32.totalorder %s13, 4
      %s20 = sphi 0, %s32
      %s21 = sphi 0, %s28
      %s22 = sphi 0, %s20
      %s23 = sphi 0, %s21
      %s24 = sphi 0, %s22
      %s25 = sphi 0, %s23
      %s37 = sphi 0, %s39
      %s40 = sphi 0, %s37
      %s41 = sphi 0, %s40
      %s57 = sphi 0, %s41
      %s65 = sphi 0, %s67
      %s68 = sphi 0, %s65
      %s69 = sphi 0, %s68
      %s85 = sphi 0, %s69
    $region4: #{tpu_custom_call.1} parent=1 // loop_header_branch
      %16 = sbr.rel (%p14) target = $region8
    $region5: #{tpu_custom_call.1} parent=1 // loop_body
      %s18 = ssub.s32 %s13, 1
      %s19 = ssub.s32 %s13, 2
      %s26 = sadd.s32 1, %s21
      %p27 = scmp.ge.s32.totalorder %s26, 1
      %s28 = scalar_select %p27, 0, %s26
      %s29 = sadd.s32 1, %s20
      %s30 = scalar_select %p27, %s29, %s20
      %p31 = scmp.ge.s32.totalorder %s30, 2
      %s32 = scalar_select %p31, 0, %s30
      %s33 = ssub.s32 %s20, %s32
      %s34 = ssub.s32 %s21, %s28
      %s35 = sor.u32 %s33, %s34
      %p36 = scmp.eq.s32.totalorder %s35, 0
      %s38 = sadd.s32 %s37, 1
      %s39 = scalar_select %p36, %s37, %s38
      %p42 = pneg %p36
      %p43 = scmp.eq.s32.totalorder %s13, 1
      %p44 = por %p42, %p43
      %p45 = scmp.ne.s32.totalorder %s37, %s40
      %p46 = scmp.eq.s32.totalorder %s13, 0
      %p47 = por %p45, %p46
      %p48 = scmp.ne.s32.totalorder %s37, %s40
      %p49 = scmp.eq.s32.totalorder %s18, 1
      %p50 = por %p48, %p49
      %p51 = scmp.ne.s32.totalorder %s40, %s41
      %p52 = scmp.eq.s32.totalorder %s18, 0
      %p53 = por %p51, %p52
      %p54 = scmp.ne.s32.totalorder %s40, %s41
      %p55 = scmp.eq.s32.totalorder %s19, 1
      %p56 = por %p54, %p55
      %p58 = scmp.ne.s32.totalorder %s41, %s57
      %p59 = scmp.eq.s32.totalorder %s19, 0
      %p60 = por %p58, %p59
      %s61 = ssub.s32 %s20, %s32
      %s62 = ssub.s32 %s21, %s28
      %s63 = sor.u32 %s61, %s62
      %p64 = scmp.eq.s32.totalorder %s63, 0
      %s66 = sadd.s32 %s65, 1
      %s67 = scalar_select %p64, %s65, %s66
      %p70 = pneg %p64
      %p71 = scmp.eq.s32.totalorder %s13, 1
      %p72 = por %p70, %p71
      %p73 = scmp.ne.s32.totalorder %s65, %s68
      %p74 = scmp.eq.s32.totalorder %s13, 0
      %p75 = por %p73, %p74
      %p76 = scmp.ne.s32.totalorder %s65, %s68
      %p77 = scmp.eq.s32.totalorder %s18, 1
      %p78 = por %p76, %p77
      %p79 = scmp.ne.s32.totalorder %s68, %s69
      %p80 = scmp.eq.s32.totalorder %s18, 0
      %p81 = por %p79, %p80
      %p82 = scmp.ne.s32.totalorder %s68, %s69
      %p83 = scmp.eq.s32.totalorder %s19, 1
      %p84 = por %p82, %p83
      %p86 = scmp.ne.s32.totalorder %s69, %s85
      %p87 = scmp.eq.s32.totalorder %s19, 0
      %p88 = por %p86, %p87
      %p89 = scmp.le.s32.totalorder 1, %s13
      %p90 = scmp.lt.s32.totalorder %s13, 3
      %p91 = pnand %p89, %p90
      %p92 = pneg %p91
      // Predicated region
      $region9: #{tpu_custom_call.1} parent=5 // pred_check
        _
      $region10: #{tpu_custom_call.1} parent=5 // pred_check_branch
        %94 = sbr.rel (%p91) target = $region12
      $region11: #{tpu_custom_call.1} parent=5 // pred_region
        %s95 = ssub.s32 %s13, 1
      $region12: #{tpu_custom_call.1} parent=5 // pred_fallthru
        _
      %p96 = scmp.lt.s32.totalorder %s13, 2
      // Predicated region
      $region13: #{tpu_custom_call.1} parent=5 // pred_check
        %p97 = pneg %p96
      $region14: #{tpu_custom_call.1} parent=5 // pred_check_branch
        %99 = sbr.rel (%p97) target = $region16
      $region15: #{tpu_custom_call.1} parent=5 // pred_region
        // Predicated region
        $region17: #{tpu_custom_call.1} parent=15 // pred_check
          %p100 = pneg %p47
        $region18: #{tpu_custom_call.1} parent=15 // pred_check_branch
          %102 = sbr.rel (%p100) target = $region20
        $region19: #{tpu_custom_call.1} parent=15 // pred_region
          %s103 = sand.u32 %s37, 1
          %s104 = scalar_lea.sflag [#allocation3], %s103
          %s105 = sand.u32 %s37, 1
          %s106 = smul.addr %s105, 8
          %s107 = scalar_lea.vmem [#allocation2], %s106
          %109 = vsyncadd %s104, 0
          %s110 = smul.addr %s20, 4
          %s111 = sadd.s32 %s21, %s110
          %s112 = smul.addr %s111, 2
          %s113 = scalar_lea.hbm %s0, %s112
          %s114 = sshll.u32 %s113, 4
          %s115 = int_to_ptr.hbm [resolvable:$true] %s114
          %s116 = sshll.u32 %s107, 4
          %s117 = int_to_ptr.vmem [resolvable:$true] %s116
          %122 = dma.hbm_to_vmem [thread:$0]  %s115, 128, %s117, %s104, 32, 32, 2
        $region20: #{tpu_custom_call.1} parent=15 // pred_fallthru
          _
      $region16: #{tpu_custom_call.1} parent=5 // pred_fallthru
        _
      %p123 = scmp.le.s32.totalorder 1, %s13
      %p124 = scmp.lt.s32.totalorder %s13, 3
      %p125 = pnand %p123, %p124
      %p126 = pneg %p125
      // Predicated region
      $region21: #{tpu_custom_call.1} parent=5 // pred_check
        _
      $region22: #{tpu_custom_call.1} parent=5 // pred_check_branch
        %128 = sbr.rel (%p125) target = $region24
      $region23: #{tpu_custom_call.1} parent=5 // pred_region
        %s129 = ssub.s32 %s13, 1
        %s130 = sand.u32 %s40, 1
        %s131 = scalar_lea.sflag [#allocation3], %s130
        %s132 = sand.u32 %s40, 1
        %s133 = smul.addr %s132, 8
        %s134 = scalar_lea.vmem [#allocation2], %s133
        // Predicated region
        $region25: #{tpu_custom_call.1} parent=23 // pred_check
          %p135 = pneg %p53
        $region26: #{tpu_custom_call.1} parent=23 // pred_check_branch
          %137 = sbr.rel (%p135) target = $region28
        $region27: #{tpu_custom_call.1} parent=23 // pred_region
          %139 = dma.done %s131, 128
        $region28: #{tpu_custom_call.1} parent=23 // pred_fallthru
          _
        %s140 = sand.u32 %s40, 1
        %s141 = scalar_lea.sflag [#allocation3], %s140
        %s142 = sand.u32 %s40, 1
        %s143 = smul.addr %s142, 8
        %s144 = scalar_lea.vmem [#allocation2], %s143
        %p145 = pneg %p53
        %p146 = pneg %p50
        %p147 = pneg %p81
        %p148 = pneg %p78
        %s149 = sand.u32 %s68, 1
        %s150 = scalar_lea.sflag [#allocation4], %s149
        %s151 = sand.u32 %s68, 1
        %s152 = smul.addr %s151, 8
        %s153 = scalar_lea.vmem [#allocation5], %s152
        %v154 = vld [vmem:[%s134] sm:$0x3]
        %v155 = vld [vmem:[%s134 + $0x2] sm:$0x3]
        %v156 = vld [vmem:[%s134 + $0x4] sm:$0x3]
        %v157 = vld [vmem:[%s134 + $0x6] sm:$0x3]
        %v158 = vmul.f32 %v154, %v154
        %v159 = vmul.f32 %v155, %v155
        %v160 = vmul.f32 %v156, %v156
        %v161 = vmul.f32 %v157, %v157
        %vm162 = vcmask 1041408
        %v163 = vsel %vm162, %v158, 0.0
        %v164 = vsel %vm162, %v159, 0.0
        %v165 = vadd.f32 %v163, %v164
        %v166 = vsel %vm162, %v160, 0.0
        %v167 = vadd.f32 %v165, %v166
        %v168 = vsel %vm162, %v161, 0.0
        %v169 = vadd.f32 %v167, %v168
        %v170 = vrsqrt.pop %v169
        %v171 = vmul.f32 %v170, %v169
        %v172 = vmul.f32 %v171, %v170
        %v173 = vmul.f32 0.5, %v172
        %v174 = vsub.f32 1.5, %v173
        %v175 = vmul.f32 %v170, %v174
        %vm176 = vweird.f32 %v169
        %vm177 = vweird.f32 %v170
        %vm178 = vmor %vm176, %vm177
        %v179 = vsel %vm178, %v170, %v175
        %v180 = vmul.f32 %v154, %v179
        %v181 = vmul.f32 %v155, %v179
        %v182 = vmul.f32 %v156, %v179
        %v183 = vmul.f32 %v157, %v179
        %184 = vst [vmem:[%s153] sm:$0x3] %v180
        %185 = vst [vmem:[%s153 + $0x2] sm:$0x3] %v181
        %186 = vst [vmem:[%s153 + $0x4] sm:$0x3] %v182
        %187 = vst [vmem:[%s153 + $0x6] sm:$0x3] %v183
        %s188 = sand.u32 %s68, 1
        %s189 = scalar_lea.sflag [#allocation4], %s188
        %s190 = sand.u32 %s68, 1
        %s191 = smul.addr %s190, 8
        %s192 = scalar_lea.vmem [#allocation5], %s191
        // Predicated region
        $region29: #{tpu_custom_call.1} parent=23 // pred_check
          %p193 = pneg %p78
        $region30: #{tpu_custom_call.1} parent=23 // pred_check_branch
          %195 = sbr.rel (%p193) target = $region32
        $region31: #{tpu_custom_call.1} parent=23 // pred_region
          %197 = vsyncadd %s189, 0
          %s198 = smul.addr %s22, 4
          %s199 = sadd.s32 %s23, %s198
          %s200 = smul.addr %s199, 2
          %s201 = scalar_lea.hbm %s1, %s200
          %s202 = sshll.u32 %s192, 4
          %s203 = int_to_ptr.vmem [resolvable:$true] %s202
          %s204 = sshll.u32 %s201, 4
          %s205 = int_to_ptr.hbm [resolvable:$true] %s204
          %210 = dma.vmem_to_hbm [thread:$0]  %s203, 128, %s205, %s189, 32, 32, 2
        $region32: #{tpu_custom_call.1} parent=23 // pred_fallthru
          _
      $region24: #{tpu_custom_call.1} parent=5 // pred_fallthru
        _
      %p211 = scmp.le.s32.totalorder 2, %s13
      // Predicated region
      $region33: #{tpu_custom_call.1} parent=5 // pred_check
        %p212 = pneg %p211
      $region34: #{tpu_custom_call.1} parent=5 // pred_check_branch
        %214 = sbr.rel (%p212) target = $region36
      $region35: #{tpu_custom_call.1} parent=5 // pred_region
        %s215 = ssub.s32 %s13, 2
        // Predicated region
        $region37: #{tpu_custom_call.1} parent=35 // pred_check
          %p216 = pneg %p84
        $region38: #{tpu_custom_call.1} parent=35 // pred_check_branch
          %218 = sbr.rel (%p216) target = $region40
        $region39: #{tpu_custom_call.1} parent=35 // pred_region
          %s219 = sand.u32 %s69, 1
          %s220 = scalar_lea.sflag [#allocation4], %s219
          %s221 = sand.u32 %s69, 1
          %s222 = smul.addr %s221, 8
          %s223 = scalar_lea.vmem [#allocation5], %s222
          %225 = dma.done %s220, 128
        $region40: #{tpu_custom_call.1} parent=35 // pred_fallthru
          _
      $region36: #{tpu_custom_call.1} parent=5 // pred_fallthru
        _
    $region6: #{tpu_custom_call.1} parent=1 // loop_footer
      %s17 = sadd.s32 1, %s13
    $region7: #{tpu_custom_call.1} parent=1 // loop_footer_branch
      %12 = sbr.rel target = $region3
    $region8: #{tpu_custom_call.1} parent=1 // loop_exit
      _
    %226 = vsyncpa [#allocation3], 1
    %s227 = scalar_lea.sflag [#allocation3], 1
    %228 = vsyncpa %s227, 1
    %229 = vsyncpa [#allocation4], 1
    %s230 = scalar_lea.sflag [#allocation4], 1
    %231 = vsyncpa %s230, 1

</llo_original>
